<compile_context>
chip_gen: v7x
topology: tpu7x:2x2x1
jax: 0.10.0
libtpu: 0.0.40
codegen_flags: <defaults>
</compile_context>

<pallas_src>
import functools

import jax
import jax.numpy as jnp
from jax.experimental import pallas as pl
from jax.experimental.pallas import tpu as pltpu

N_MID = 1024          # GoogLeNet feature width
EMB = 128             # embedding_size
MARGIN = 1.0
BN_EPS = 1e-5

# Keep each streamed x block comfortably small so 2x double-buffering fits the
# default scoped-VMEM limit on every generation (v5e 16 MiB, v6e/v7x 32 MiB),
# with room left for the resident stem weights and output block.
_X_BLOCK_BYTE_BUDGET = 4 * 1024 * 1024


# --------------------------------------------------------------------------
# Kernel 1: gridded GAP reduction over H*W + C->1024 linear stem
# --------------------------------------------------------------------------
def gap_stem_kernel(x_ref, w_stem_ref, b_stem_ref, y_ref, acc_ref, *, inv_hw):
    # x_ref: (tile_b, C, tile_hw) ; acc_ref: (tile_b, C) f32 scratch
    k = pl.program_id(1)

    @pl.when(k == 0)
    def _init():
        acc_ref[...] = jnp.zeros_like(acc_ref)

    # Partial spatial sum for this HW tile (f32 accumulation, XLU lane reduce).
    acc_ref[...] += jnp.sum(x_ref[...].astype(jnp.float32), axis=-1)

    @pl.when(k == pl.num_programs(1) - 1)
    def _finalize():
        pooled = acc_ref[...] * inv_hw                   # (tile_b, C) f32
        w = w_stem_ref[...]                              # (C, N_MID) f32
        c_in = w.shape[0]
        tile_b = pooled.shape[0]
        if c_in <= 8:
            # Tiny contraction depth: VPU broadcast-FMA instead of an MXU pass
            # that would run at <3% utilization.
            y = jnp.broadcast_to(b_stem_ref[...], (tile_b, w.shape[1]))
            for c in range(c_in):
                y = y + pooled[:, c:c + 1] * w[c:c + 1, :]
        else:
            y = jnp.dot(pooled, w, preferred_element_type=jnp.float32)
            y = y + b_stem_ref[...]
        y_ref[...] = y


# --------------------------------------------------------------------------
# Kernel 2: BatchNorm1d (batch stats) + fc1 + triplet loss
# --------------------------------------------------------------------------
def head_kernel(y_ref, gamma_ref, beta_ref, w_fc_ref, b_fc_ref, z_ref, jm_ref):
    y = y_ref[...]                                       # (B, N_MID) f32
    b = y.shape[0]

    # ---- BatchNorm1d, training-mode batch statistics (biased variance) ----
    mean = jnp.mean(y, axis=0, keepdims=True)            # (1, N_MID)
    var = jnp.mean((y - mean) ** 2, axis=0, keepdims=True)
    xhat = (y - mean) * jax.lax.rsqrt(var + BN_EPS)
    emb = gamma_ref[...] * xhat + beta_ref[...]          # (B, N_MID)

    # ---- fc1: Linear(1024 -> EMB) on the MXU ----
    z = jnp.dot(emb, w_fc_ref[...],
                preferred_element_type=jnp.float32) + b_fc_ref[...]   # (B, EMB)
    z_ref[...] = z

    # ---- TripletLoss over consecutive (anchor, positive, negative) rows ----
    # Neighbor differences via offset slices (no one-hot selection matmuls);
    # rows 3t carry the valid triplets, everything else is masked out.
    a = z[0:b - 2, :]                                    # rows t   (anchors)
    nb1 = z[1:b - 1, :]                                  # rows t+1
    nb2 = z[2:b, :]                                      # rows t+2
    d_ap = jnp.sum((a - nb1) ** 2, axis=-1, keepdims=True)   # (B-2, 1)
    d_an = jnp.sum((a - nb2) ** 2, axis=-1, keepdims=True)
    per = jnp.maximum(d_ap - d_an + MARGIN, 0.0)
    row = jax.lax.broadcasted_iota(jnp.int32, (b - 2, 1), 0)
    per = jnp.where(row % 3 == 0, per, 0.0)
    n_trip = b // 3
    jm_ref[...] = jnp.sum(per, axis=0, keepdims=True) * (1.0 / n_trip)


# --------------------------------------------------------------------------
# Wrapper
# --------------------------------------------------------------------------
def _pick_hw_tile(hw, tile_b, c, elem_bytes):
    """Largest multiple-of-128 divisor of hw whose x block fits the budget."""
    if hw % 128 != 0:
        return hw
    tile_hw = 128
    while (tile_hw * 2 <= hw and hw % (tile_hw * 2) == 0
           and tile_b * c * (tile_hw * 2) * elem_bytes <= _X_BLOCK_BYTE_BUDGET):
        tile_hw *= 2
    return tile_hw


def triplet_base_forward(x, params, *, tile_hw=None):
    """x: (B, C, H, W), B divisible by 3. Returns (jm, embedding_y_orig, embedding_z)."""
    B, C, H, W = x.shape
    assert B % 3 == 0, "batch must contain whole (anchor, positive, negative) triplets"
    HW = H * W

    # Stream x in its native dtype; the (B,C,H,W)->(B,C,HW) reshape is a free
    # metadata change on a contiguous array (no extra HBM pass).
    x2 = x.reshape(B, C, HW)
    elem_bytes = x2.dtype.itemsize

    # Batch tile: full 8-row sublanes when possible (lane/sublane-dense stores)
    # and >1 batch tiles so the "parallel" axis can shard across TensorCores.
    tile_b = 8 if B % 8 == 0 else B
    if tile_hw is None:
        tile_hw = _pick_hw_tile(HW, tile_b, C, elem_bytes)
    assert HW % tile_hw == 0 and (tile_hw % 128 == 0 or tile_hw == HW)

    grid = (B // tile_b, HW // tile_hw)

    # ---- Kernel 1: pipelined GAP + stem, batch parallel / HW reduction ----
    y_orig = pl.pallas_call(
        functools.partial(gap_stem_kernel, inv_hw=1.0 / HW),
        out_shape=jax.ShapeDtypeStruct((B, N_MID), jnp.float32),
        grid_spec=pltpu.PrefetchScalarGridSpec(
            num_scalar_prefetch=0,
            grid=grid,
            in_specs=[
                pl.BlockSpec((tile_b, C, tile_hw), lambda i, k: (i, 0, k)),
                pl.BlockSpec((C, N_MID), lambda i, k: (0, 0)),
                pl.BlockSpec((1, N_MID), lambda i, k: (0, 0)),
            ],
            out_specs=pl.BlockSpec((tile_b, N_MID), lambda i, k: (i, 0)),
            scratch_shapes=[pltpu.VMEM((tile_b, C), jnp.float32)],
        ),
        compiler_params=pltpu.CompilerParams(
            dimension_semantics=("parallel", "arbitrary")),
    )(x2, params["w_stem"], params["b_stem"])

    # ---- Kernel 2: BN + fc1 + triplet loss (tiny, whole-array resident) ----
    vmem = pl.BlockSpec(memory_space=pltpu.MemorySpace.VMEM)
    z, jm = pl.pallas_call(
        head_kernel,
        out_shape=(jax.ShapeDtypeStruct((B, EMB), jnp.float32),
                   jax.ShapeDtypeStruct((1, 1), jnp.float32)),
        in_specs=[vmem] * 5,
        out_specs=(vmem, vmem),
    )(y_orig, params["gamma"], params["beta"], params["w_fc"], params["b_fc"])

    return jm[0, 0], y_orig, z


def init_params(key, c_in):
    k1, k2, k3, k4 = jax.random.split(key, 4)
    return {
        # backbone stand-in projection C -> 1024
        "w_stem": 0.05 * jax.random.normal(k1, (c_in, N_MID), jnp.float32),
        "b_stem": 0.01 * jax.random.normal(k2, (1, N_MID), jnp.float32),
        # BatchNorm1d(1024): default affine init
        "gamma": jnp.ones((1, N_MID), jnp.float32),
        "beta": jnp.zeros((1, N_MID), jnp.float32),
        # fc1: Linear(1024, EMB); stored transposed (in, out)
        "w_fc": 0.02 * jax.random.normal(k3, (N_MID, EMB), jnp.float32),
        "b_fc": 0.01 * jax.random.normal(k4, (1, EMB), jnp.float32),
    }


if __name__ == "__main__":
    key = jax.random.PRNGKey(0)
    kx, kp = jax.random.split(key)

    # 8 (anchor, positive, negative) triplets; B is a multiple of both 3 and 8
    # so batch tiles are full 8-row sublanes.
    B, C, H, W = 24, 4, 16, 16
    x = jax.random.normal(kx, (B, C, H, W), jnp.float32)
    params = init_params(kp, C)

    # tile_hw=128 -> 2 HW reduction steps, exercising the gridded accumulator.
    jm, y_orig, z = triplet_base_forward(x, params, tile_hw=128)
    jax.block_until_ready((jm, y_orig, z))

    assert y_orig.shape == (B, N_MID)
    assert z.shape == (B, EMB)
    assert jm.shape == ()
    print("KERNEL_OK")
</pallas_src>

<mosaic_0001>
module attributes {stable_mosaic.version = 11 : i64} {
  func.func @gap_stem_kernel(%arg0: i32, %arg1: i32, %arg2: memref<8x4x128xf32, #tpu.memory_space<vmem>>, %arg3: memref<4x1024xf32, #tpu.memory_space<vmem>>, %arg4: memref<1x1024xf32, #tpu.memory_space<vmem>>, %arg5: memref<8x1024xf32, #tpu.memory_space<vmem>>, %arg6: memref<8x4xf32, #tpu.memory_space<vmem>>) attributes {dimension_semantics = [#tpu.dimension_semantics<parallel>, #tpu.dimension_semantics<arbitrary>], iteration_bounds = array<i64: 3, 2>, scalar_prefetch = 0 : i64, scratch_operands = 1 : i64, tpu.core_type = #tpu.core_type<tc>, window_params = [{transform_indices = @transform_0, window_bounds = array<i64: 8, 4, 128>}, {pipeline_mode = #tpu.pipeline_mode<synchronous>, transform_indices = @transform_1, window_bounds = array<i64: 4, 1024>}, {pipeline_mode = #tpu.pipeline_mode<synchronous>, transform_indices = @transform_2, window_bounds = array<i64: 1, 1024>}, {transform_indices = @transform_3, window_bounds = array<i64: 8, 1024>}]} {
    %c0_i32 = arith.constant 0 : i32
    %0 = arith.cmpi eq, %arg1, %c0_i32 : i32
    %1 = arith.extui %0 : i1 to i32
    %c0_i32_0 = arith.constant 0 : i32
    %2 = arith.cmpi ne, %1, %c0_i32_0 : i32
    scf.if %2 {
      %cst_8 = arith.constant 0.000000e+00 : f32
      %11 = vector.broadcast %cst_8 : f32 to vector<8x4xf32>
      %c0_9 = arith.constant 0 : index
      %c0_10 = arith.constant 0 : index
      %12 = vector.load %arg6[%c0_9, %c0_10] : memref<8x4xf32, #tpu.memory_space<vmem>>, vector<8x4xf32>
      tpu.vector_store %arg6[%c0_9, %c0_10], %11 {strides = array<i32>} : memref<8x4xf32, #tpu.memory_space<vmem>>, vector<8x4xf32>,
    } else {
    }
    %c0 = arith.constant 0 : index
    %c0_1 = arith.constant 0 : index
    %3 = vector.load %arg6[%c0, %c0_1] : memref<8x4xf32, #tpu.memory_space<vmem>>, vector<8x4xf32>
    %c0_2 = arith.constant 0 : index
    %c0_3 = arith.constant 0 : index
    %c0_4 = arith.constant 0 : index
    %4 = vector.load %arg2[%c0_2, %c0_3, %c0_4] : memref<8x4x128xf32, #tpu.memory_space<vmem>>, vector<8x4x128xf32>
    %cst = arith.constant dense<0.000000e+00> : vector<8x4xf32>
    %5 = vector.multi_reduction <add>, %4, %cst [2] : vector<8x4x128xf32> to vector<8x4xf32>
    %6 = arith.addf %3, %5 : vector<8x4xf32>
    %c0_5 = arith.constant 0 : index
    %c0_6 = arith.constant 0 : index
    %7 = vector.load %arg6[%c0_5, %c0_6] : memref<8x4xf32, #tpu.memory_space<vmem>>, vector<8x4xf32>
    tpu.vector_store %arg6[%c0_5, %c0_6], %6 {strides = array<i32>} : memref<8x4xf32, #tpu.memory_space<vmem>>, vector<8x4xf32>,
    %c1_i32 = arith.constant 1 : i32
    %8 = arith.cmpi eq, %arg1, %c1_i32 : i32
    %9 = arith.extui %8 : i1 to i32
    %c0_i32_7 = arith.constant 0 : i32
    %10 = arith.cmpi ne, %9, %c0_i32_7 : i32
    scf.if %10 {
      %c0_8 = arith.constant 0 : index
      %c0_9 = arith.constant 0 : index
      %11 = vector.load %arg6[%c0_8, %c0_9] : memref<8x4xf32, #tpu.memory_space<vmem>>, vector<8x4xf32>
      %cst_10 = arith.constant 3.906250e-03 : f32
      %12 = vector.broadcast %cst_10 : f32 to vector<8x4xf32>
      %13 = arith.mulf %11, %12 : vector<8x4xf32>
      %c0_11 = arith.constant 0 : index
      %c0_12 = arith.constant 0 : index
      %14 = vector.load %arg3[%c0_11, %c0_12] : memref<4x1024xf32, #tpu.memory_space<vmem>>, vector<4x1024xf32>
      %c0_13 = arith.constant 0 : index
      %c0_14 = arith.constant 0 : index
      %15 = vector.load %arg4[%c0_13, %c0_14] : memref<1x1024xf32, #tpu.memory_space<vmem>>, vector<1x1024xf32>
      %16 = vector.shape_cast %15 : vector<1x1024xf32> to vector<1x1024xf32>
      %17 = vector.broadcast %16 : vector<1x1024xf32> to vector<8x1024xf32>
      %18 = vector.extract_strided_slice %13 {offsets = [0, 0], sizes = [8, 1], strides = [1, 1]} : vector<8x4xf32> to vector<8x1xf32>
      %19 = vector.extract_strided_slice %14 {offsets = [0, 0], sizes = [1, 1024], strides = [1, 1]} : vector<4x1024xf32> to vector<1x1024xf32>
      %20 = vector.broadcast %18 : vector<8x1xf32> to vector<8x1024xf32>
      %21 = vector.broadcast %19 : vector<1x1024xf32> to vector<8x1024xf32>
      %22 = arith.mulf %20, %21 : vector<8x1024xf32>
      %23 = arith.addf %17, %22 : vector<8x1024xf32>
      %24 = vector.extract_strided_slice %13 {offsets = [0, 1], sizes = [8, 1], strides = [1, 1]} : vector<8x4xf32> to vector<8x1xf32>
      %25 = vector.extract_strided_slice %14 {offsets = [1, 0], sizes = [1, 1024], strides = [1, 1]} : vector<4x1024xf32> to vector<1x1024xf32>
      %26 = vector.broadcast %24 : vector<8x1xf32> to vector<8x1024xf32>
      %27 = vector.broadcast %25 : vector<1x1024xf32> to vector<8x1024xf32>
      %28 = arith.mulf %26, %27 : vector<8x1024xf32>
      %29 = arith.addf %23, %28 : vector<8x1024xf32>
      %30 = vector.extract_strided_slice %13 {offsets = [0, 2], sizes = [8, 1], strides = [1, 1]} : vector<8x4xf32> to vector<8x1xf32>
      %31 = vector.extract_strided_slice %14 {offsets = [2, 0], sizes = [1, 1024], strides = [1, 1]} : vector<4x1024xf32> to vector<1x1024xf32>
      %32 = vector.broadcast %30 : vector<8x1xf32> to vector<8x1024xf32>
      %33 = vector.broadcast %31 : vector<1x1024xf32> to vector<8x1024xf32>
      %34 = arith.mulf %32, %33 : vector<8x1024xf32>
      %35 = arith.addf %29, %34 : vector<8x1024xf32>
      %36 = vector.extract_strided_slice %13 {offsets = [0, 3], sizes = [8, 1], strides = [1, 1]} : vector<8x4xf32> to vector<8x1xf32>
      %37 = vector.extract_strided_slice %14 {offsets = [3, 0], sizes = [1, 1024], strides = [1, 1]} : vector<4x1024xf32> to vector<1x1024xf32>
      %38 = vector.broadcast %36 : vector<8x1xf32> to vector<8x1024xf32>
      %39 = vector.broadcast %37 : vector<1x1024xf32> to vector<8x1024xf32>
      %40 = arith.mulf %38, %39 : vector<8x1024xf32>
      %41 = arith.addf %35, %40 : vector<8x1024xf32>
      %c0_15 = arith.constant 0 : index
      %c0_16 = arith.constant 0 : index
      %42 = vector.load %arg5[%c0_15, %c0_16] : memref<8x1024xf32, #tpu.memory_space<vmem>>, vector<8x1024xf32>
      tpu.vector_store %arg5[%c0_15, %c0_16], %41 {strides = array<i32>} : memref<8x1024xf32, #tpu.memory_space<vmem>>, vector<8x1024xf32>,
    } else {
    }
    return
  }
  func.func @transform_0(%arg0: i32, %arg1: i32) -> (i32, i32, i32) {
    %c0_i32 = arith.constant 0 : i32
    %c0_i32_0 = arith.constant 0 : i32
    return %arg0, %c0_i32, %arg1 : i32, i32, i32
  }
  func.func @transform_1(%arg0: i32, %arg1: i32) -> (i32, i32) {
    %c0_i32 = arith.constant 0 : i32
    %c0_i32_0 = arith.constant 0 : i32
    %c0_i32_1 = arith.constant 0 : i32
    return %c0_i32, %c0_i32_0 : i32, i32
  }
  func.func @transform_2(%arg0: i32, %arg1: i32) -> (i32, i32) {
    %c0_i32 = arith.constant 0 : i32
    %c0_i32_0 = arith.constant 0 : i32
    %c0_i32_1 = arith.constant 0 : i32
    return %c0_i32, %c0_i32_0 : i32, i32
  }
  func.func @transform_3(%arg0: i32, %arg1: i32) -> (i32, i32) {
    %c0_i32 = arith.constant 0 : i32
    %c0_i32_0 = arith.constant 0 : i32
    return %arg0, %c0_i32 : i32, i32
  }
}

</mosaic_0001>

<llo_original>
// kernel: tpu_custom_call.1
$region0: #{tpu_custom_call.1}
  #allocation0 [shape = 'u32[]', space=smem, size = 0x4, offset = 0x4, fixed_abs, tag = 'smem constant byte address 0x4 - core index']
  #allocation1 [shape = 'u32[144,128]{1,0:T(1,128)}', space=vmem, size = 0x12000, scoped, tag = 'internal scratch']
  #allocation2 [shape = 'f32[8,4]{1,0:T(8,128)}', space=vmem, size = 0x1000, scoped, tag = 'scratch operand']
  %s0 = inlined_call_operand.hbm [shape: f32[24,4,256], index: 0, kind: input, shape index: {}]
  %s1 = inlined_call_operand.hbm [shape: f32[4,1024], index: 1, kind: input, shape index: {}]
  %s2 = inlined_call_operand.hbm [shape: f32[1,1024], index: 2, kind: input, shape index: {}]
  %s3 = inlined_call_operand.hbm [shape: f32[24,1024], index: 3, kind: output, shape index: {}]
  %s4 = sld [smem:[#allocation0]]
  $region65: #{tpu_custom_call.1} parent=0
    _
  %s6 = ssub.s32 1, %s4
  %s7 = scalar_select 0, %s6, %s4
  $region1: #{tpu_custom_call.1} parent=0
    #allocation3 [shape = 'u8[32768]{0}', space=vmem, size = 0x8000, scoped, tag = 'input window, operand 0']
    #allocation4 [shape = 's32[2]{0}', space=sflag, size = 0x8, scoped, tag = 'scoped memory for tpu_custom_call.1']
    #allocation5 [shape = 's32[2]{0}', space=sflag, size = 0x8, scoped, tag = 'scoped memory for tpu_custom_call.1']
    #allocation6 [shape = 'u8[16384]{0}', space=vmem, size = 0x4000, scoped, tag = 'input window, operand 1, single buffered']
    #allocation7 [shape = 's32[1]{0}', space=sflag, size = 0x4, scoped, tag = 'scoped memory for tpu_custom_call.1']
    #allocation8 [shape = 'u8[4096]{0}', space=vmem, size = 0x1000, scoped, tag = 'input window, operand 2, single buffered']
    #allocation9 [shape = 'u8[65536]{0}', space=vmem, size = 0x10000, scoped, tag = 'output window, operand 0']
    %8 = vsyncpa [#allocation4], 0
    %s9 = scalar_lea.sflag [#allocation4], 1
    %10 = vsyncpa %s9, 0
    %11 = vsyncpa [#allocation7], 0
    %12 = vsyncpa [#allocation5], 0
    %s13 = scalar_lea.sflag [#allocation5], 1
    %14 = vsyncpa %s13, 0
    loop: start=0, step=1, limit=8
    $region2: #{tpu_custom_call.1} parent=1 // loop_pre_header
      _
    $region3: #{tpu_custom_call.1} parent=1 // loop_header
      %s16 = sphi 0, %s20
      %p17 = scmp.ge.s32.totalorder %s16, 8
      %s23 = sphi 0, %s35
      %s24 = sphi 0, %s31
      %s25 = sphi 0, %s23
      %s26 = sphi 0, %s24
      %s27 = sphi 0, %s25
      %s28 = sphi 0, %s26
      %s40 = sphi 0, %s42
      %s43 = sphi 0, %s40
      %s44 = sphi 0, %s43
      %s60 = sphi 0, %s44
      %s64 = sphi 0, %s64
      %s66 = sphi 0, %s64
      %s67 = sphi 0, %s66
      %s81 = sphi 0, %s67
      %s85 = sphi 0, %s85
      %s87 = sphi 0, %s85
      %s88 = sphi 0, %s87
      %s102 = sphi 0, %s88
      %s108 = sphi 0, %s110
      %s111 = sphi 0, %s108
      %s112 = sphi 0, %s111
      %s128 = sphi 0, %s112
    $region4: #{tpu_custom_call.1} parent=1 // loop_header_branch
      %19 = sbr.rel (%p17) target = $region8
    $region5: #{tpu_custom_call.1} parent=1 // loop_body
      %s21 = ssub.s32 %s16, 1
      %s22 = ssub.s32 %s16, 2
      %s29 = sadd.s32 1, %s24
      %p30 = scmp.ge.s32.totalorder %s29, 2
      %s31 = scalar_select %p30, 0, %s29
      %s32 = sadd.s32 1, %s23
      %s33 = scalar_select %p30, %s32, %s23
      %p34 = scmp.ge.s32.totalorder %s33, 3
      %s35 = scalar_select %p34, 0, %s33
      %s36 = ssub.s32 %s23, %s35
      %s37 = ssub.s32 %s24, %s31
      %s38 = sor.u32 %s36, %s37
      %p39 = scmp.eq.s32.totalorder %s38, 0
      %s41 = sadd.s32 %s40, 1
      %s42 = scalar_select %p39, %s40, %s41
      %p45 = pneg %p39
      %p46 = scmp.eq.s32.totalorder %s16, 5
      %p47 = por %p45, %p46
      %p48 = scmp.ne.s32.totalorder %s40, %s43
      %p49 = scmp.eq.s32.totalorder %s16, 0
      %p50 = por %p48, %p49
      %p51 = scmp.ne.s32.totalorder %s40, %s43
      %p52 = scmp.eq.s32.totalorder %s21, 5
      %p53 = por %p51, %p52
      %p54 = scmp.ne.s32.totalorder %s43, %s44
      %p55 = scmp.eq.s32.totalorder %s21, 0
      %p56 = por %p54, %p55
      %p57 = scmp.ne.s32.totalorder %s43, %s44
      %p58 = scmp.eq.s32.totalorder %s22, 5
      %p59 = por %p57, %p58
      %p61 = scmp.ne.s32.totalorder %s44, %s60
      %p62 = scmp.eq.s32.totalorder %s22, 0
      %p63 = por %p61, %p62
      %s65 = sadd.s32 %s64, 1
      %p68 = scmp.eq.s32.totalorder %s16, 5
      %p69 = scmp.ne.s32.totalorder %s64, %s66
      %p70 = scmp.eq.s32.totalorder %s16, 0
      %p71 = por %p69, %p70
      %p72 = scmp.ne.s32.totalorder %s64, %s66
      %p73 = scmp.eq.s32.totalorder %s21, 5
      %p74 = por %p72, %p73
      %p75 = scmp.ne.s32.totalorder %s66, %s67
      %p76 = scmp.eq.s32.totalorder %s21, 0
      %p77 = por %p75, %p76
      %p78 = scmp.ne.s32.totalorder %s66, %s67
      %p79 = scmp.eq.s32.totalorder %s22, 5
      %p80 = por %p78, %p79
      %p82 = scmp.ne.s32.totalorder %s67, %s81
      %p83 = scmp.eq.s32.totalorder %s22, 0
      %p84 = por %p82, %p83
      %s86 = sadd.s32 %s85, 1
      %p89 = scmp.eq.s32.totalorder %s16, 5
      %p90 = scmp.ne.s32.totalorder %s85, %s87
      %p91 = scmp.eq.s32.totalorder %s16, 0
      %p92 = por %p90, %p91
      %p93 = scmp.ne.s32.totalorder %s85, %s87
      %p94 = scmp.eq.s32.totalorder %s21, 5
      %p95 = por %p93, %p94
      %p96 = scmp.ne.s32.totalorder %s87, %s88
      %p97 = scmp.eq.s32.totalorder %s21, 0
      %p98 = por %p96, %p97
      %p99 = scmp.ne.s32.totalorder %s87, %s88
      %p100 = scmp.eq.s32.totalorder %s22, 5
      %p101 = por %p99, %p100
      %p103 = scmp.ne.s32.totalorder %s88, %s102
      %p104 = scmp.eq.s32.totalorder %s22, 0
      %p105 = por %p103, %p104
      %s106 = ssub.s32 %s23, %s35
      %p107 = scmp.eq.s32.totalorder %s106, 0
      %s109 = sadd.s32 %s108, 1
      %s110 = scalar_select %p107, %s108, %s109
      %p113 = pneg %p107
      %p114 = scmp.eq.s32.totalorder %s16, 5
      %p115 = por %p113, %p114
      %p116 = scmp.ne.s32.totalorder %s108, %s111
      %p117 = scmp.eq.s32.totalorder %s16, 0
      %p118 = por %p116, %p117
      %p119 = scmp.ne.s32.totalorder %s108, %s111
      %p120 = scmp.eq.s32.totalorder %s21, 5
      %p121 = por %p119, %p120
      %p122 = scmp.ne.s32.totalorder %s111, %s112
      %p123 = scmp.eq.s32.totalorder %s21, 0
      %p124 = por %p122, %p123
      %p125 = scmp.ne.s32.totalorder %s111, %s112
      %p126 = scmp.eq.s32.totalorder %s22, 5
      %p127 = por %p125, %p126
      %p129 = scmp.ne.s32.totalorder %s112, %s128
      %p130 = scmp.eq.s32.totalorder %s22, 0
      %p131 = por %p129, %p130
      %p132 = scmp.le.s32.totalorder 1, %s16
      %p133 = scmp.lt.s32.totalorder %s16, 7
      %p134 = pnand %p132, %p133
      %p135 = pneg %p134
      // Predicated region
      $region9: #{tpu_custom_call.1} parent=5 // pred_check
        _
      $region10: #{tpu_custom_call.1} parent=5 // pred_check_branch
        %137 = sbr.rel (%p134) target = $region12
      $region11: #{tpu_custom_call.1} parent=5 // pred_region
        %s138 = ssub.s32 %s16, 1
        // Predicated region
        $region13: #{tpu_custom_call.1} parent=11 // pred_check
          %p139 = pneg %p77
        $region14: #{tpu_custom_call.1} parent=11 // pred_check_branch
          %141 = sbr.rel (%p139) target = $region16
        $region15: #{tpu_custom_call.1} parent=11 // pred_region
          %s143 = ssub.s32 512, 512
          %144 = vsyncadd [#allocation7], %s143
          %s146 = sshll.u32 [#allocation6], 4
          %s147 = int_to_ptr.vmem [resolvable:$true] %s146
          %149 = dma.hbm_to_vmem [thread:$0]  %s1, 512, %s147, [#allocation7]
        $region16: #{tpu_custom_call.1} parent=11 // pred_fallthru
          _
        // Predicated region
        $region17: #{tpu_custom_call.1} parent=11 // pred_check
          %p150 = pneg %p98
        $region18: #{tpu_custom_call.1} parent=11 // pred_check_branch
          %152 = sbr.rel (%p150) target = $region20
        $region19: #{tpu_custom_call.1} parent=11 // pred_region
          %s154 = ssub.s32 128, 128
          %155 = vsyncadd [#allocation7], %s154
          %s157 = sshll.u32 [#allocation8], 4
          %s158 = int_to_ptr.vmem [resolvable:$true] %s157
          %160 = dma.hbm_to_vmem [thread:$0]  %s2, 128, %s158, [#allocation7]
        $region20: #{tpu_custom_call.1} parent=11 // pred_fallthru
          _
      $region12: #{tpu_custom_call.1} parent=5 // pred_fallthru
        _
      %p161 = scmp.lt.s32.totalorder %s16, 6
      // Predicated region
      $region21: #{tpu_custom_call.1} parent=5 // pred_check
        %p162 = pneg %p161
      $region22: #{tpu_custom_call.1} parent=5 // pred_check_branch
        %164 = sbr.rel (%p162) target = $region24
      $region23: #{tpu_custom_call.1} parent=5 // pred_region
        // Predicated region
        $region25: #{tpu_custom_call.1} parent=23 // pred_check
          %p165 = pneg %p50
        $region26: #{tpu_custom_call.1} parent=23 // pred_check_branch
          %167 = sbr.rel (%p165) target = $region28
        $region27: #{tpu_custom_call.1} parent=23 // pred_region
          %s168 = sand.u32 %s40, 1
          %s169 = scalar_lea.sflag [#allocation4], %s168
          %s170 = sand.u32 %s40, 1
          %s171 = smul.addr %s170, 32
          %s172 = scalar_lea.vmem [#allocation3], %s171
          %s173 = smul.u32 8, %s23
          %s175 = ssub.s32 512, 512
          %176 = vsyncadd %s169, %s175
          %s177 = smul.addr %s173, 2
          %s178 = sadd.s32 %s24, %s177
          %s179 = smul.addr %s178, 64
          %s180 = scalar_lea.hbm %s0, %s179
          %s181 = sshll.u32 %s172, 4
          %s182 = int_to_ptr.vmem [resolvable:$true] %s181
          %187 = dma.hbm_to_vmem [thread:$0]  %s180, 512, %s182, %s169, 128, 64, 4
        $region28: #{tpu_custom_call.1} parent=23 // pred_fallthru
          _
      $region24: #{tpu_custom_call.1} parent=5 // pred_fallthru
        _
      %p188 = scmp.le.s32.totalorder 1, %s16
      %p189 = scmp.lt.s32.totalorder %s16, 7
      %p190 = pnand %p188, %p189
      %p191 = pneg %p190
      // Predicated region
      $region29: #{tpu_custom_call.1} parent=5 // pred_check
        _
      $region30: #{tpu_custom_call.1} parent=5 // pred_check_branch
        %193 = sbr.rel (%p190) target = $region32
      $region31: #{tpu_custom_call.1} parent=5 // pred_region
        %s194 = ssub.s32 %s16, 1
        %s195 = sand.u32 %s43, 1
        %s196 = scalar_lea.sflag [#allocation4], %s195
        %s197 = sand.u32 %s43, 1
        %s198 = smul.addr %s197, 32
        %s199 = scalar_lea.vmem [#allocation3], %s198
        // Predicated region
        $region33: #{tpu_custom_call.1} parent=31 // pred_check
          %p200 = pneg %p56
        $region34: #{tpu_custom_call.1} parent=31 // pred_check_branch
          %202 = sbr.rel (%p200) target = $region36
        $region35: #{tpu_custom_call.1} parent=31 // pred_region
          %203 = dma.done %s196, 512
        $region36: #{tpu_custom_call.1} parent=31 // pred_fallthru
          _
        // Predicated region
        $region37: #{tpu_custom_call.1} parent=31 // pred_check
          %p204 = pneg %p77
        $region38: #{tpu_custom_call.1} parent=31 // pred_check_branch
          %206 = sbr.rel (%p204) target = $region40
        $region39: #{tpu_custom_call.1} parent=31 // pred_region
          %207 = dma.done [#allocation7], 512
        $region40: #{tpu_custom_call.1} parent=31 // pred_fallthru
          _
        // Predicated region
        $region41: #{tpu_custom_call.1} parent=31 // pred_check
          %p208 = pneg %p98
        $region42: #{tpu_custom_call.1} parent=31 // pred_check_branch
          %210 = sbr.rel (%p208) target = $region44
        $region43: #{tpu_custom_call.1} parent=31 // pred_region
          %211 = dma.done [#allocation7], 128
        $region44: #{tpu_custom_call.1} parent=31 // pred_fallthru
          _
        %s212 = sand.u32 %s43, 1
        %s213 = scalar_lea.sflag [#allocation4], %s212
        %s214 = sand.u32 %s43, 1
        %s215 = smul.addr %s214, 32
        %s216 = scalar_lea.vmem [#allocation3], %s215
        %p217 = pneg %p56
        %p218 = pneg %p53
        %p219 = pneg %p77
        %p220 = pneg %p74
        %p221 = pneg %p98
        %p222 = pneg %p95
        %p223 = pneg %p124
        %p224 = pneg %p121
        %s225 = sand.u32 %s111, 1
        %s226 = scalar_lea.sflag [#allocation5], %s225
        %s227 = sand.u32 %s111, 1
        %s228 = smul.addr %s227, 64
        %s229 = scalar_lea.vmem [#allocation9], %s228
        %s230 = smul.u32 8, %s25
        %p231 = scmp.eq.s32.totalorder %s26, 0
        // Predicated region
        $region45: #{tpu_custom_call.1} parent=31 // pred_check
          %p232 = pneg %p231
        $region46: #{tpu_custom_call.1} parent=31 // pred_check_branch
          %234 = sbr.rel (%p232) target = $region48
        $region47: #{tpu_custom_call.1} parent=31 // pred_region
          %vm235 = vcmask 31744
          %236 = vst.msk [vmem:[#allocation2] sm:$0xff] %vm235, 0.0
        $region48: #{tpu_custom_call.1} parent=31 // pred_fallthru
          _
        %v237 = vld [vmem:[#allocation2] sm:$0xff]
        %v238 = vld [vmem:[%s199] sm:$0xf]
        %v239 = vld [vmem:[%s199 + $0x4] sm:$0xf]
        %v240 = vld [vmem:[%s199 + $0x8] sm:$0xf]
        %v241 = vld [vmem:[%s199 + $0xc] sm:$0xf]
        %v242 = vld [vmem:[%s199 + $0x10] sm:$0xf]
        %v243 = vld [vmem:[%s199 + $0x14] sm:$0xf]
        %v244 = vld [vmem:[%s199 + $0x18] sm:$0xf]
        %v245 = vld [vmem:[%s199 + $0x1c] sm:$0xf]
        %vm246 = vcmask 1043456
        %v247 = vsel %vm246, %v238, 0.0
        %248 = vadd.xlane.f32.xlu0 %v247
        %v249 = vpop.xlane.xlu0 %248
        %v250 = vsel %vm246, %v239, 0.0
        %251 = vadd.xlane.f32.xlu0 %v250
        %v252 = vpop.xlane.xlu0 %251
        %v253 = vsel %vm246, %v240, 0.0
        %254 = vadd.xlane.f32.xlu0 %v253
        %v255 = vpop.xlane.xlu0 %254
        %v256 = vsel %vm246, %v241, 0.0
        %257 = vadd.xlane.f32.xlu0 %v256
        %v258 = vpop.xlane.xlu0 %257
        %v259 = vsel %vm246, %v242, 0.0
        %260 = vadd.xlane.f32.xlu0 %v259
        %v261 = vpop.xlane.xlu0 %260
        %v262 = vsel %vm246, %v243, 0.0
        %263 = vadd.xlane.f32.xlu0 %v262
        %v264 = vpop.xlane.xlu0 %263
        %v265 = vsel %vm246, %v244, 0.0
        %266 = vadd.xlane.f32.xlu0 %v265
        %v267 = vpop.xlane.xlu0 %266
        %v268 = vsel %vm246, %v245, 0.0
        %269 = vadd.xlane.f32.xlu0 %v268
        %v270 = vpop.xlane.xlu0 %269
        %v279 = vlaneseq
        %v280 = vand.u32 %v279, 127
        %v281 = vlaneseq
        %v282 = vshrl.u32 %v281, 7
        %v283 = vsub.s32 %v280, %v282
        %v284 = vrot.slane %v249, %v283
        %v285 = vlaneseq
        %v286 = vshrl.u32 %v285, 7
        %v287 = vsub.s32 %v280, %v286
        %v288 = vrot.slane %v252, %v287
        %v289 = vlaneseq
        %v290 = vshrl.u32 %v289, 7
        %v291 = vsub.s32 %v280, %v290
        %v292 = vrot.slane %v255, %v291
        %v293 = vlaneseq
        %v294 = vshrl.u32 %v293, 7
        %v295 = vsub.s32 %v280, %v294
        %v296 = vrot.slane %v258, %v295
        %v297 = vlaneseq
        %v298 = vshrl.u32 %v297, 7
        %v299 = vsub.s32 %v280, %v298
        %v300 = vrot.slane %v261, %v299
        %v301 = vlaneseq
        %v302 = vshrl.u32 %v301, 7
        %v303 = vsub.s32 %v280, %v302
        %v304 = vrot.slane %v264, %v303
        %v305 = vlaneseq
        %v306 = vshrl.u32 %v305, 7
        %v307 = vsub.s32 %v280, %v306
        %v308 = vrot.slane %v267, %v307
        %v309 = vlaneseq
        %v310 = vshrl.u32 %v309, 7
        %v311 = vsub.s32 %v280, %v310
        %v312 = vrot.slane %v270, %v311
        %vm313 = vcmask 1041409
        %v314 = vsel %vm313, %v288, %v284
        %vm315 = vcmask 1042434
        %v316 = vsel %vm315, %v292, %v314
        %vm317 = vcmask 1043459
        %v318 = vsel %vm317, %v296, %v316
        %vm319 = vcmask 1044484
        %v320 = vsel %vm319, %v300, %v318
        %vm321 = vcmask 1045509
        %v322 = vsel %vm321, %v304, %v320
        %vm323 = vcmask 1046534
        %v324 = vsel %vm323, %v308, %v322
        %vm325 = vcmask 1047559
        %v326 = vsel %vm325, %v312, %v324
        %v328 = vadd.f32 %v237, %v326
        %vm329 = vcmask 31744
        %330 = vst.msk [vmem:[#allocation2] sm:$0xff] %vm329, %v328
        %p331 = scmp.eq.s32.totalorder %s26, 1
        // Predicated region
        $region49: #{tpu_custom_call.1} parent=31 // pred_check
          %p332 = pneg %p331
        $region50: #{tpu_custom_call.1} parent=31 // pred_check_branch
          %334 = sbr.rel (%p332) target = $region52
        $region51: #{tpu_custom_call.1} parent=31 // pred_region
          %v335 = vld [vmem:[#allocation2] sm:$0xff]
          %v336 = vmul.f32 %v335, 0.00390625
          %v337 = vld [vmem:[#allocation6] sm:$0xff]
          %v338 = vld [vmem:[#allocation6 + $0x8] sm:$0xff]
          %v339 = vld [vmem:[#allocation6 + $0x10] sm:$0xff]
          %v340 = vld [vmem:[#allocation6 + $0x18] sm:$0xff]
          %v341 = vld [vmem:[#allocation8] sm:$0xff]
          %v343 = vlaneseq
          %v344 = vshrl.u32 %v343, 7
          %v345 = vsub.s32 0, %v344
          %v346 = vrot.slane %v341, %v345
          %v347 = vlaneseq
          %v348 = vshrl.u32 %v347, 7
          %v349 = vsub.s32 1, %v348
          %v350 = vrot.slane %v341, %v349
          %v351 = vlaneseq
          %v352 = vshrl.u32 %v351, 7
          %v353 = vsub.s32 2, %v352
          %v354 = vrot.slane %v341, %v353
          %v355 = vlaneseq
          %v356 = vshrl.u32 %v355, 7
          %v357 = vsub.s32 3, %v356
          %v358 = vrot.slane %v341, %v357
          %v359 = vlaneseq
          %v360 = vshrl.u32 %v359, 7
          %v361 = vsub.s32 4, %v360
          %v362 = vrot.slane %v341, %v361
          %v363 = vlaneseq
          %v364 = vshrl.u32 %v363, 7
          %v365 = vsub.s32 5, %v364
          %v366 = vrot.slane %v341, %v365
          %v367 = vlaneseq
          %v368 = vshrl.u32 %v367, 7
          %v369 = vsub.s32 6, %v368
          %v370 = vrot.slane %v341, %v369
          %v371 = vlaneseq
          %v372 = vshrl.u32 %v371, 7
          %v373 = vsub.s32 7, %v372
          %v374 = vrot.slane %v341, %v373
          %384 = vset.pattern.permute.xlu0 0
          %385 = vperm.xlu0 %384, %v336
          %v386 = vpop.permute.xlu0 %385
          %v392 = vlaneseq
          %v393 = vshrl.u32 %v392, 7
          %v394 = vsub.s32 0, %v393
          %v395 = vrot.slane %v337, %v394
          %v396 = vlaneseq
          %v397 = vshrl.u32 %v396, 7
          %v398 = vsub.s32 4, %v397
          %v399 = vrot.slane %v337, %v398
          %v400 = vlaneseq
          %v401 = vshrl.u32 %v400, 7
          %v402 = vsub.s32 0, %v401
          %v403 = vrot.slane %v338, %v402
          %v404 = vlaneseq
          %v405 = vshrl.u32 %v404, 7
          %v406 = vsub.s32 4, %v405
          %v407 = vrot.slane %v338, %v406
          %v408 = vlaneseq
          %v409 = vshrl.u32 %v408, 7
          %v410 = vsub.s32 0, %v409
          %v411 = vrot.slane %v339, %v410
          %v412 = vlaneseq
          %v413 = vshrl.u32 %v412, 7
          %v414 = vsub.s32 4, %v413
          %v415 = vrot.slane %v339, %v414
          %v416 = vlaneseq
          %v417 = vshrl.u32 %v416, 7
          %v418 = vsub.s32 0, %v417
          %v419 = vrot.slane %v340, %v418
          %v420 = vlaneseq
          %v421 = vshrl.u32 %v420, 7
          %v422 = vsub.s32 4, %v421
          %v423 = vrot.slane %v340, %v422
          %v432 = vlaneseq
          %v433 = vshrl.u32 %v432, 7
          %v434 = vsub.s32 0, %v433
          %v435 = vrot.slane %v395, %v434
          %v436 = vlaneseq
          %v437 = vshrl.u32 %v436, 7
          %v438 = vsub.s32 0, %v437
          %v439 = vrot.slane %v399, %v438
          %v440 = vlaneseq
          %v441 = vshrl.u32 %v440, 7
          %v442 = vsub.s32 0, %v441
          %v443 = vrot.slane %v403, %v442
          %v444 = vlaneseq
          %v445 = vshrl.u32 %v444, 7
          %v446 = vsub.s32 0, %v445
          %v447 = vrot.slane %v407, %v446
          %v448 = vlaneseq
          %v449 = vshrl.u32 %v448, 7
          %v450 = vsub.s32 0, %v449
          %v451 = vrot.slane %v411, %v450
          %v452 = vlaneseq
          %v453 = vshrl.u32 %v452, 7
          %v454 = vsub.s32 0, %v453
          %v455 = vrot.slane %v415, %v454
          %v456 = vlaneseq
          %v457 = vshrl.u32 %v456, 7
          %v458 = vsub.s32 0, %v457
          %v459 = vrot.slane %v419, %v458
          %v460 = vlaneseq
          %v461 = vshrl.u32 %v460, 7
          %v462 = vsub.s32 0, %v461
          %v463 = vrot.slane %v423, %v462
          %v464 = vmul.f32 %v386, %v435
          %v465 = vmul.f32 %v386, %v439
          %v466 = vmul.f32 %v386, %v443
          %v467 = vmul.f32 %v386, %v447
          %v468 = vmul.f32 %v386, %v451
          %v469 = vmul.f32 %v386, %v455
          %v470 = vmul.f32 %v386, %v459
          %v471 = vmul.f32 %v386, %v463
          %v472 = vadd.f32 %v346, %v464
          %v473 = vadd.f32 %v350, %v465
          %v474 = vadd.f32 %v354, %v466
          %v475 = vadd.f32 %v358, %v467
          %v476 = vadd.f32 %v362, %v468
          %v477 = vadd.f32 %v366, %v469
          %v478 = vadd.f32 %v370, %v470
          %v479 = vadd.f32 %v374, %v471
          %480 = vset.pattern.permute.xlu0 1
          %481 = vperm.xlu0 %480, %v336
          %v482 = vpop.permute.xlu0 %481
          %v484 = vlaneseq
          %v485 = vshrl.u32 %v484, 7
          %v486 = vsub.s32 1, %v485
          %v487 = vrot.slane %v337, %v486
          %v488 = vlaneseq
          %v489 = vshrl.u32 %v488, 7
          %v490 = vsub.s32 5, %v489
          %v491 = vrot.slane %v337, %v490
          %v492 = vlaneseq
          %v493 = vshrl.u32 %v492, 7
          %v494 = vsub.s32 1, %v493
          %v495 = vrot.slane %v338, %v494
          %v496 = vlaneseq
          %v497 = vshrl.u32 %v496, 7
          %v498 = vsub.s32 5, %v497
          %v499 = vrot.slane %v338, %v498
          %v500 = vlaneseq
          %v501 = vshrl.u32 %v500, 7
          %v502 = vsub.s32 1, %v501
          %v503 = vrot.slane %v339, %v502
          %v504 = vlaneseq
          %v505 = vshrl.u32 %v504, 7
          %v506 = vsub.s32 5, %v505
          %v507 = vrot.slane %v339, %v506
          %v508 = vlaneseq
          %v509 = vshrl.u32 %v508, 7
          %v510 = vsub.s32 1, %v509
          %v511 = vrot.slane %v340, %v510
          %v512 = vlaneseq
          %v513 = vshrl.u32 %v512, 7
          %v514 = vsub.s32 5, %v513
          %v515 = vrot.slane %v340, %v514
          %v524 = vlaneseq
          %v525 = vshrl.u32 %v524, 7
          %v526 = vsub.s32 1, %v525
          %v527 = vrot.slane %v487, %v526
          %v528 = vlaneseq
          %v529 = vshrl.u32 %v528, 7
          %v530 = vsub.s32 1, %v529
          %v531 = vrot.slane %v491, %v530
          %v532 = vlaneseq
          %v533 = vshrl.u32 %v532, 7
          %v534 = vsub.s32 1, %v533
          %v535 = vrot.slane %v495, %v534
          %v536 = vlaneseq
          %v537 = vshrl.u32 %v536, 7
          %v538 = vsub.s32 1, %v537
          %v539 = vrot.slane %v499, %v538
          %v540 = vlaneseq
          %v541 = vshrl.u32 %v540, 7
          %v542 = vsub.s32 1, %v541
          %v543 = vrot.slane %v503, %v542
          %v544 = vlaneseq
          %v545 = vshrl.u32 %v544, 7
          %v546 = vsub.s32 1, %v545
          %v547 = vrot.slane %v507, %v546
          %v548 = vlaneseq
          %v549 = vshrl.u32 %v548, 7
          %v550 = vsub.s32 1, %v549
          %v551 = vrot.slane %v511, %v550
          %v552 = vlaneseq
          %v553 = vshrl.u32 %v552, 7
          %v554 = vsub.s32 1, %v553
          %v555 = vrot.slane %v515, %v554
          %v556 = vmul.f32 %v482, %v527
          %v557 = vmul.f32 %v482, %v531
          %v558 = vmul.f32 %v482, %v535
          %v559 = vmul.f32 %v482, %v539
          %v560 = vmul.f32 %v482, %v543
          %v561 = vmul.f32 %v482, %v547
          %v562 = vmul.f32 %v482, %v551
          %v563 = vmul.f32 %v482, %v555
          %v564 = vadd.f32 %v472, %v556
          %v565 = vadd.f32 %v473, %v557
          %v566 = vadd.f32 %v474, %v558
          %v567 = vadd.f32 %v475, %v559
          %v568 = vadd.f32 %v476, %v560
          %v569 = vadd.f32 %v477, %v561
          %v570 = vadd.f32 %v478, %v562
          %v571 = vadd.f32 %v479, %v563
          %572 = vset.pattern.permute.xlu0 2
          %573 = vperm.xlu0 %572, %v336
          %v574 = vpop.permute.xlu0 %573
          %v576 = vlaneseq
          %v577 = vshrl.u32 %v576, 7
          %v578 = vsub.s32 2, %v577
          %v579 = vrot.slane %v337, %v578
          %v580 = vlaneseq
          %v581 = vshrl.u32 %v580, 7
          %v582 = vsub.s32 6, %v581
          %v583 = vrot.slane %v337, %v582
          %v584 = vlaneseq
          %v585 = vshrl.u32 %v584, 7
          %v586 = vsub.s32 2, %v585
          %v587 = vrot.slane %v338, %v586
          %v588 = vlaneseq
          %v589 = vshrl.u32 %v588, 7
          %v590 = vsub.s32 6, %v589
          %v591 = vrot.slane %v338, %v590
          %v592 = vlaneseq
          %v593 = vshrl.u32 %v592, 7
          %v594 = vsub.s32 2, %v593
          %v595 = vrot.slane %v339, %v594
          %v596 = vlaneseq
          %v597 = vshrl.u32 %v596, 7
          %v598 = vsub.s32 6, %v597
          %v599 = vrot.slane %v339, %v598
          %v600 = vlaneseq
          %v601 = vshrl.u32 %v600, 7
          %v602 = vsub.s32 2, %v601
          %v603 = vrot.slane %v340, %v602
          %v604 = vlaneseq
          %v605 = vshrl.u32 %v604, 7
          %v606 = vsub.s32 6, %v605
          %v607 = vrot.slane %v340, %v606
          %v616 = vlaneseq
          %v617 = vshrl.u32 %v616, 7
          %v618 = vsub.s32 2, %v617
          %v619 = vrot.slane %v579, %v618
          %v620 = vlaneseq
          %v621 = vshrl.u32 %v620, 7
          %v622 = vsub.s32 2, %v621
          %v623 = vrot.slane %v583, %v622
          %v624 = vlaneseq
          %v625 = vshrl.u32 %v624, 7
          %v626 = vsub.s32 2, %v625
          %v627 = vrot.slane %v587, %v626
          %v628 = vlaneseq
          %v629 = vshrl.u32 %v628, 7
          %v630 = vsub.s32 2, %v629
          %v631 = vrot.slane %v591, %v630
          %v632 = vlaneseq
          %v633 = vshrl.u32 %v632, 7
          %v634 = vsub.s32 2, %v633
          %v635 = vrot.slane %v595, %v634
          %v636 = vlaneseq
          %v637 = vshrl.u32 %v636, 7
          %v638 = vsub.s32 2, %v637
          %v639 = vrot.slane %v599, %v638
          %v640 = vlaneseq
          %v641 = vshrl.u32 %v640, 7
          %v642 = vsub.s32 2, %v641
          %v643 = vrot.slane %v603, %v642
          %v644 = vlaneseq
          %v645 = vshrl.u32 %v644, 7
          %v646 = vsub.s32 2, %v645
          %v647 = vrot.slane %v607, %v646
          %v648 = vmul.f32 %v574, %v619
          %v649 = vmul.f32 %v574, %v623
          %v650 = vmul.f32 %v574, %v627
          %v651 = vmul.f32 %v574, %v631
          %v652 = vmul.f32 %v574, %v635
          %v653 = vmul.f32 %v574, %v639
          %v654 = vmul.f32 %v574, %v643
          %v655 = vmul.f32 %v574, %v647
          %v656 = vadd.f32 %v564, %v648
          %v657 = vadd.f32 %v565, %v649
          %v658 = vadd.f32 %v566, %v650
          %v659 = vadd.f32 %v567, %v651
          %v660 = vadd.f32 %v568, %v652
          %v661 = vadd.f32 %v569, %v653
          %v662 = vadd.f32 %v570, %v654
          %v663 = vadd.f32 %v571, %v655
          %664 = vset.pattern.permute.xlu0 3
          %665 = vperm.xlu0 %664, %v336
          %v666 = vpop.permute.xlu0 %665
          %v668 = vlaneseq
          %v669 = vshrl.u32 %v668, 7
          %v670 = vsub.s32 3, %v669
          %v671 = vrot.slane %v337, %v670
          %v672 = vlaneseq
          %v673 = vshrl.u32 %v672, 7
          %v674 = vsub.s32 7, %v673
          %v675 = vrot.slane %v337, %v674
          %v676 = vlaneseq
          %v677 = vshrl.u32 %v676, 7
          %v678 = vsub.s32 3, %v677
          %v679 = vrot.slane %v338, %v678
          %v680 = vlaneseq
          %v681 = vshrl.u32 %v680, 7
          %v682 = vsub.s32 7, %v681
          %v683 = vrot.slane %v338, %v682
          %v684 = vlaneseq
          %v685 = vshrl.u32 %v684, 7
          %v686 = vsub.s32 3, %v685
          %v687 = vrot.slane %v339, %v686
          %v688 = vlaneseq
          %v689 = vshrl.u32 %v688, 7
          %v690 = vsub.s32 7, %v689
          %v691 = vrot.slane %v339, %v690
          %v692 = vlaneseq
          %v693 = vshrl.u32 %v692, 7
          %v694 = vsub.s32 3, %v693
          %v695 = vrot.slane %v340, %v694
          %v696 = vlaneseq
          %v697 = vshrl.u32 %v696, 7
          %v698 = vsub.s32 7, %v697
          %v699 = vrot.slane %v340, %v698
          %v708 = vlaneseq
          %v709 = vshrl.u32 %v708, 7
          %v710 = vsub.s32 3, %v709
          %v711 = vrot.slane %v671, %v710
          %v712 = vlaneseq
          %v713 = vshrl.u32 %v712, 7
          %v714 = vsub.s32 3, %v713
          %v715 = vrot.slane %v675, %v714
          %v716 = vlaneseq
          %v717 = vshrl.u32 %v716, 7
          %v718 = vsub.s32 3, %v717
          %v719 = vrot.slane %v679, %v718
          %v720 = vlaneseq
          %v721 = vshrl.u32 %v720, 7
          %v722 = vsub.s32 3, %v721
          %v723 = vrot.slane %v683, %v722
          %v724 = vlaneseq
          %v725 = vshrl.u32 %v724, 7
          %v726 = vsub.s32 3, %v725
          %v727 = vrot.slane %v687, %v726
          %v728 = vlaneseq
          %v729 = vshrl.u32 %v728, 7
          %v730 = vsub.s32 3, %v729
          %v731 = vrot.slane %v691, %v730
          %v732 = vlaneseq
          %v733 = vshrl.u32 %v732, 7
          %v734 = vsub.s32 3, %v733
          %v735 = vrot.slane %v695, %v734
          %v736 = vlaneseq
          %v737 = vshrl.u32 %v736, 7
          %v738 = vsub.s32 3, %v737
          %v739 = vrot.slane %v699, %v738
          %v740 = vmul.f32 %v666, %v711
          %v741 = vmul.f32 %v666, %v715
          %v742 = vmul.f32 %v666, %v719
          %v743 = vmul.f32 %v666, %v723
          %v744 = vmul.f32 %v666, %v727
          %v745 = vmul.f32 %v666, %v731
          %v746 = vmul.f32 %v666, %v735
          %v747 = vmul.f32 %v666, %v739
          %v748 = vadd.f32 %v656, %v740
          %v749 = vadd.f32 %v657, %v741
          %v750 = vadd.f32 %v658, %v742
          %v751 = vadd.f32 %v659, %v743
          %v752 = vadd.f32 %v660, %v744
          %v753 = vadd.f32 %v661, %v745
          %v754 = vadd.f32 %v662, %v746
          %v755 = vadd.f32 %v663, %v747
          %756 = vst [vmem:[%s229] sm:$0xff] %v748
          %757 = vst [vmem:[%s229 + $0x8] sm:$0xff] %v749
          %758 = vst [vmem:[%s229 + $0x10] sm:$0xff] %v750
          %759 = vst [vmem:[%s229 + $0x18] sm:$0xff] %v751
          %760 = vst [vmem:[%s229 + $0x20] sm:$0xff] %v752
          %761 = vst [vmem:[%s229 + $0x28] sm:$0xff] %v753
          %762 = vst [vmem:[%s229 + $0x30] sm:$0xff] %v754
          %763 = vst [vmem:[%s229 + $0x38] sm:$0xff] %v755
        $region52: #{tpu_custom_call.1} parent=31 // pred_fallthru
          _
        %s764 = sand.u32 %s111, 1
        %s765 = scalar_lea.sflag [#allocation5], %s764
        %s766 = sand.u32 %s111, 1
        %s767 = smul.addr %s766, 64
        %s768 = scalar_lea.vmem [#allocation9], %s767
        // Predicated region
        $region53: #{tpu_custom_call.1} parent=31 // pred_check
          %p769 = pneg %p121
        $region54: #{tpu_custom_call.1} parent=31 // pred_check_branch
          %771 = sbr.rel (%p769) target = $region56
        $region55: #{tpu_custom_call.1} parent=31 // pred_region
          %s773 = ssub.s32 1024, 1024
          %774 = vsyncadd %s765, %s773
          %s775 = smul.addr %s25, 8
          %s776 = smul.addr %s775, 128
          %s777 = scalar_lea.hbm %s3, %s776
          %s779 = sshll.u32 %s768, 4
          %s780 = int_to_ptr.vmem [resolvable:$true] %s779
          %782 = dma.vmem_to_hbm [thread:$0]  %s780, 1024, %s777, %s765
        $region56: #{tpu_custom_call.1} parent=31 // pred_fallthru
          _
      $region32: #{tpu_custom_call.1} parent=5 // pred_fallthru
        _
      %p783 = scmp.le.s32.totalorder 2, %s16
      // Predicated region
      $region57: #{tpu_custom_call.1} parent=5 // pred_check
        %p784 = pneg %p783
      $region58: #{tpu_custom_call.1} parent=5 // pred_check_branch
        %786 = sbr.rel (%p784) target = $region60
      $region59: #{tpu_custom_call.1} parent=5 // pred_region
        %s787 = ssub.s32 %s16, 2
        // Predicated region
        $region61: #{tpu_custom_call.1} parent=59 // pred_check
          %p788 = pneg %p127
        $region62: #{tpu_custom_call.1} parent=59 // pred_check_branch
          %790 = sbr.rel (%p788) target = $region64
        $region63: #{tpu_custom_call.1} parent=59 // pred_region
          %s791 = sand.u32 %s112, 1
          %s792 = scalar_lea.sflag [#allocation5], %s791
          %s793 = sand.u32 %s112, 1
          %s794 = smul.addr %s793, 64
          %s795 = scalar_lea.vmem [#allocation9], %s794
          %796 = dma.done %s792, 1024
        $region64: #{tpu_custom_call.1} parent=59 // pred_fallthru
          _
      $region60: #{tpu_custom_call.1} parent=5 // pred_fallthru
        _
    $region6: #{tpu_custom_call.1} parent=1 // loop_footer
      %s20 = sadd.s32 1, %s16
    $region7: #{tpu_custom_call.1} parent=1 // loop_footer_branch
      %15 = sbr.rel target = $region3
    $region8: #{tpu_custom_call.1} parent=1 // loop_exit
      _
    %797 = vsyncpa [#allocation4], 1
    %s798 = scalar_lea.sflag [#allocation4], 1
    %799 = vsyncpa %s798, 1
    %800 = vsyncpa [#allocation7], 1
    %801 = vsyncpa [#allocation5], 1
    %s802 = scalar_lea.sflag [#allocation5], 1
    %803 = vsyncpa %s802, 1

</llo_original>
